<compile_context>
chip_gen: v7x
topology: tpu7x:2x2x1
jax: 0.10.0
libtpu: 0.0.40
codegen_flags: <defaults>
</compile_context>

<pallas_src>
import jax
import jax.numpy as jnp
from jax.experimental import pallas as pl
from jax.experimental.pallas import tpu as pltpu

# ----------------------------- configuration -----------------------------
B = 2                       # batch
N = 1                       # the torch forward unsqueezes a 3-D input to N=1
T, H, W = 2, 8, 8           # thw_shape (before flattening)
C = 32                      # channel dim
KH = KW = 3                 # spatial pool kernel
SH = SW = 2                 # spatial pool stride
PH = PW = 1                 # spatial pool padding
H_OUT = (H + 2 * PH - KH) // SH + 1
W_OUT = (W + 2 * PW - KW) // SW + 1
L_IN = 1 + T * H * W        # +1 for cls token
L_OUT = 1 + T * H_OUT * W_OUT
LN_EPS = 1e-5


# ----------------------- fused pool + LayerNorm kernel -----------------------
def _fused_pool_ln_kernel(ee_ref, eo_ref, oe_ref, oo_ref, cls_ref, g_ref,
                          b_ref, o_ref):
    """Fused 3x3/s2/p1 spatial max-pool + cls concat + LayerNorm.

    ee_ref: (M, HO, WO, C)      even-row / even-col input phase
    eo_ref: (M, HO, WO+1, C)    even-row / odd-col phase, -inf col prepended
    oe_ref: (M, HO+1, WO, C)    odd-row / even-col phase, -inf row prepended
    oo_ref: (M, HO+1, WO+1, C)  odd-row / odd-col phase, -inf row+col prepended
    cls_ref: (BN, C)   g_ref/b_ref: (1, C)   o_ref: (BN * (1 + T*HO*WO), C)
    where M = B*N*T and BN = B*N.
    """
    m_dim, ho, wo, c = ee_ref.shape
    bn = cls_ref.shape[0]
    t = m_dim // bn
    l_sp = t * ho * wo
    l_out = 1 + l_sp

    f32 = jnp.float32
    ee = ee_ref[...].astype(f32)
    eo = eo_ref[...].astype(f32)
    oe = oe_ref[...].astype(f32)
    oo = oo_ref[...].astype(f32)

    # out[oh, ow] = max over window rows {2oh-1, 2oh, 2oh+1},
    #               cols {2ow-1, 2ow, 2ow+1}; out-of-range entries are the
    #               -inf halo already baked into the odd-phase operands.
    pooled = ee                                          # row 2oh,   col 2ow
    pooled = jnp.maximum(pooled, eo[:, :, :-1, :])       # row 2oh,   col 2ow-1
    pooled = jnp.maximum(pooled, eo[:, :, 1:, :])        # row 2oh,   col 2ow+1
    pooled = jnp.maximum(pooled, oe[:, :-1, :, :])       # row 2oh-1, col 2ow
    pooled = jnp.maximum(pooled, oe[:, 1:, :, :])        # row 2oh+1, col 2ow
    pooled = jnp.maximum(pooled, oo[:, :-1, :-1, :])     # row 2oh-1, col 2ow-1
    pooled = jnp.maximum(pooled, oo[:, :-1, 1:, :])      # row 2oh-1, col 2ow+1
    pooled = jnp.maximum(pooled, oo[:, 1:, :-1, :])      # row 2oh+1, col 2ow-1
    pooled = jnp.maximum(pooled, oo[:, 1:, 1:, :])       # row 2oh+1, col 2ow+1

    # (b*n*t, ho, wo, c) -> (b*n * t*ho*wo, c): contiguous flatten, no transpose.
    sp_tokens = pooled.reshape(bn * l_sp, c)

    gamma = g_ref[...].astype(f32)                       # (1, C)
    beta = b_ref[...].astype(f32)                        # (1, C)

    def _layernorm(v):                                   # v: (rows, C) f32
        mu = jnp.mean(v, axis=-1, keepdims=True)
        vc = v - mu
        var = jnp.mean(vc * vc, axis=-1, keepdims=True)
        return vc * jax.lax.rsqrt(var + LN_EPS) * gamma + beta

    sp_n = _layernorm(sp_tokens)                         # (BN*L_SP, C)
    cls_n = _layernorm(cls_ref[...].astype(f32))         # (BN, C)

    for i in range(bn):                                  # static unroll (BN=2)
        o_ref[pl.ds(i * l_out, 1), :] = cls_n[i:i + 1].astype(o_ref.dtype)
        o_ref[pl.ds(i * l_out + 1, l_sp), :] = (
            sp_n[i * l_sp:(i + 1) * l_sp].astype(o_ref.dtype))


# --------------------------- forward (wrapper) ------------------------------
def attention_pool_forward(x, thw_shape, gamma, beta, has_cls_embed=True,
                           pool=True):
    """Mirrors AttentionPool.forward with pool=MaxPool3d((1,3,3),(1,2,2),(0,1,1))
    and norm=LayerNorm.  x: (B, L, C) or (B, N, L, C).  Returns (y, thw_out)."""
    if not pool:
        return x, thw_shape

    tensor_dim = x.ndim
    if tensor_dim == 4:
        x4 = x
    elif tensor_dim == 3:
        x4 = x[:, None]
    else:
        raise NotImplementedError(f"Unsupported input dimension {x.shape}")
    if not has_cls_embed:
        # TODO(synk): has_cls_embed=False variant (same kernel minus cls rows).
        raise NotImplementedError("only has_cls_embed=True is implemented")

    b, n, _, c = x4.shape
    t, h, w = thw_shape
    assert h % SH == 0 and w % SW == 0, "phase-split pooling needs even H, W"
    h_out = (h + 2 * PH - KH) // SH + 1
    w_out = (w + 2 * PW - KW) // SW + 1
    l_out = 1 + t * h_out * w_out

    cls_tok = x4[:, :, 0, :].reshape(b * n, c)
    sp = x4[:, :, 1:, :].reshape(b * n * t, h, w, c)

    # Stride-2 phase split + -inf halo done once outside the kernel, so the
    # kernel only performs unit-stride slices and elementwise maxima.
    ninf = -jnp.inf
    ee = sp[:, 0::2, 0::2, :]
    eo = jnp.pad(sp[:, 0::2, 1::2, :], ((0, 0), (0, 0), (1, 0), (0, 0)),
                 constant_values=ninf)
    oe = jnp.pad(sp[:, 1::2, 0::2, :], ((0, 0), (1, 0), (0, 0), (0, 0)),
                 constant_values=ninf)
    oo = jnp.pad(sp[:, 1::2, 1::2, :], ((0, 0), (1, 0), (1, 0), (0, 0)),
                 constant_values=ninf)

    g2 = gamma.reshape(1, c)
    b2 = beta.reshape(1, c)

    vmem = pl.BlockSpec(memory_space=pltpu.MemorySpace.VMEM)
    y2d = pl.pallas_call(
        _fused_pool_ln_kernel,
        out_shape=jax.ShapeDtypeStruct((b * n * l_out, c), x.dtype),
        in_specs=[vmem] * 7,
        out_specs=vmem,
    )(ee, eo, oe, oo, cls_tok, g2, b2)

    y = y2d.reshape(b, n, l_out, c)
    if tensor_dim == 3:
        y = y[:, 0]
    return y, [t, h_out, w_out]


# ------------------------------ reference -----------------------------------
def _ref_forward(x, thw_shape, gamma, beta):
    """Pure-JAX reference mirroring MaxPool3d((1,3,3),(1,2,2),(0,1,1)) + LN."""
    x4 = x[:, None]
    cls_tok, sp = x4[:, :, :1, :], x4[:, :, 1:, :]
    b, n, _, c = sp.shape
    t, h, w = thw_shape
    h_out = (h + 2 * PH - KH) // SH + 1
    w_out = (w + 2 * PW - KW) // SW + 1
    sp = sp.reshape(b * n * t, h, w, c)
    xp = jnp.pad(sp, ((0, 0), (PH, PH), (PW, PW), (0, 0)),
                 constant_values=-jnp.inf)
    pooled = None
    for kh in range(KH):
        for kw in range(KW):
            win = xp[:, kh:kh + SH * (h_out - 1) + 1:SH,
                     kw:kw + SW * (w_out - 1) + 1:SW, :]
            pooled = win if pooled is None else jnp.maximum(pooled, win)
    pooled = pooled.reshape(b, n, t * h_out * w_out, c)
    y = jnp.concatenate([cls_tok, pooled], axis=2)
    mu = jnp.mean(y, axis=-1, keepdims=True)
    var = jnp.mean((y - mu) ** 2, axis=-1, keepdims=True)
    y = (y - mu) * jax.lax.rsqrt(var + LN_EPS) * gamma + beta
    return y[:, 0]


# --------------------------------- main --------------------------------------
if __name__ == "__main__":
    key = jax.random.PRNGKey(0)
    kx, kg, kb = jax.random.split(key, 3)
    x = jax.random.normal(kx, (B, L_IN, C), dtype=jnp.float32)
    gamma = 1.0 + 0.1 * jax.random.normal(kg, (C,), dtype=jnp.float32)
    beta = 0.1 * jax.random.normal(kb, (C,), dtype=jnp.float32)

    y, thw_out = attention_pool_forward(x, [T, H, W], gamma, beta,
                                        has_cls_embed=True)
    y = jax.block_until_ready(y)

    y_ref = _ref_forward(x, [T, H, W], gamma, beta)
    assert y.shape == (B, L_OUT, C), y.shape
    assert thw_out == [T, H_OUT, W_OUT], thw_out
    max_err = float(jnp.max(jnp.abs(y - y_ref)))
    assert max_err < 1e-5, max_err
    print("KERNEL_OK")
</pallas_src>

<mosaic_0001>
module attributes {stable_mosaic.version = 11 : i64} {
  func.func @_fused_pool_ln_kernel(%arg0: memref<4x4x4x32xf32, #tpu.memory_space<vmem>>, %arg1: memref<4x4x5x32xf32, #tpu.memory_space<vmem>>, %arg2: memref<4x5x4x32xf32, #tpu.memory_space<vmem>>, %arg3: memref<4x5x5x32xf32, #tpu.memory_space<vmem>>, %arg4: memref<2x32xf32, #tpu.memory_space<vmem>>, %arg5: memref<1x32xf32, #tpu.memory_space<vmem>>, %arg6: memref<1x32xf32, #tpu.memory_space<vmem>>, %arg7: memref<66x32xf32, #tpu.memory_space<vmem>>) attributes {dimension_semantics = [], scalar_prefetch = 0 : i64, scratch_operands = 0 : i64, tpu.core_type = #tpu.core_type<tc>} {
    %c0 = arith.constant 0 : index
    %c0_0 = arith.constant 0 : index
    %c0_1 = arith.constant 0 : index
    %c0_2 = arith.constant 0 : index
    %0 = vector.load %arg0[%c0, %c0_0, %c0_1, %c0_2] : memref<4x4x4x32xf32, #tpu.memory_space<vmem>>, vector<4x4x4x32xf32>
    %c0_3 = arith.constant 0 : index
    %c0_4 = arith.constant 0 : index
    %c0_5 = arith.constant 0 : index
    %c0_6 = arith.constant 0 : index
    %1 = vector.load %arg1[%c0_3, %c0_4, %c0_5, %c0_6] : memref<4x4x5x32xf32, #tpu.memory_space<vmem>>, vector<4x4x5x32xf32>
    %c0_7 = arith.constant 0 : index
    %c0_8 = arith.constant 0 : index
    %c0_9 = arith.constant 0 : index
    %c0_10 = arith.constant 0 : index
    %2 = vector.load %arg2[%c0_7, %c0_8, %c0_9, %c0_10] : memref<4x5x4x32xf32, #tpu.memory_space<vmem>>, vector<4x5x4x32xf32>
    %c0_11 = arith.constant 0 : index
    %c0_12 = arith.constant 0 : index
    %c0_13 = arith.constant 0 : index
    %c0_14 = arith.constant 0 : index
    %3 = vector.load %arg3[%c0_11, %c0_12, %c0_13, %c0_14] : memref<4x5x5x32xf32, #tpu.memory_space<vmem>>, vector<4x5x5x32xf32>
    %4 = vector.extract_strided_slice %1 {offsets = [0, 0, 0, 0], sizes = [4, 4, 4, 32], strides = [1, 1, 1, 1]} : vector<4x4x5x32xf32> to vector<4x4x4x32xf32>
    %5 = arith.maximumf %0, %4 : vector<4x4x4x32xf32>
    %6 = vector.extract_strided_slice %1 {offsets = [0, 0, 1, 0], sizes = [4, 4, 4, 32], strides = [1, 1, 1, 1]} : vector<4x4x5x32xf32> to vector<4x4x4x32xf32>
    %7 = arith.maximumf %5, %6 : vector<4x4x4x32xf32>
    %8 = vector.extract_strided_slice %2 {offsets = [0, 0, 0, 0], sizes = [4, 4, 4, 32], strides = [1, 1, 1, 1]} : vector<4x5x4x32xf32> to vector<4x4x4x32xf32>
    %9 = arith.maximumf %7, %8 : vector<4x4x4x32xf32>
    %10 = vector.extract_strided_slice %2 {offsets = [0, 1, 0, 0], sizes = [4, 4, 4, 32], strides = [1, 1, 1, 1]} : vector<4x5x4x32xf32> to vector<4x4x4x32xf32>
    %11 = arith.maximumf %9, %10 : vector<4x4x4x32xf32>
    %12 = vector.extract_strided_slice %3 {offsets = [0, 0, 0, 0], sizes = [4, 4, 4, 32], strides = [1, 1, 1, 1]} : vector<4x5x5x32xf32> to vector<4x4x4x32xf32>
    %13 = arith.maximumf %11, %12 : vector<4x4x4x32xf32>
    %14 = vector.extract_strided_slice %3 {offsets = [0, 0, 1, 0], sizes = [4, 4, 4, 32], strides = [1, 1, 1, 1]} : vector<4x5x5x32xf32> to vector<4x4x4x32xf32>
    %15 = arith.maximumf %13, %14 : vector<4x4x4x32xf32>
    %16 = vector.extract_strided_slice %3 {offsets = [0, 1, 0, 0], sizes = [4, 4, 4, 32], strides = [1, 1, 1, 1]} : vector<4x5x5x32xf32> to vector<4x4x4x32xf32>
    %17 = arith.maximumf %15, %16 : vector<4x4x4x32xf32>
    %18 = vector.extract_strided_slice %3 {offsets = [0, 1, 1, 0], sizes = [4, 4, 4, 32], strides = [1, 1, 1, 1]} : vector<4x5x5x32xf32> to vector<4x4x4x32xf32>
    %19 = arith.maximumf %17, %18 : vector<4x4x4x32xf32>
    %20 = vector.shape_cast %19 : vector<4x4x4x32xf32> to vector<64x32xf32>
    %c0_15 = arith.constant 0 : index
    %c0_16 = arith.constant 0 : index
    %21 = vector.load %arg5[%c0_15, %c0_16] : memref<1x32xf32, #tpu.memory_space<vmem>>, vector<1x32xf32>
    %c0_17 = arith.constant 0 : index
    %c0_18 = arith.constant 0 : index
    %22 = vector.load %arg6[%c0_17, %c0_18] : memref<1x32xf32, #tpu.memory_space<vmem>>, vector<1x32xf32>
    %cst = arith.constant dense<0.000000e+00> : vector<64xf32>
    %23 = vector.multi_reduction <add>, %20, %cst [1] : vector<64x32xf32> to vector<64xf32>
    %24 = vector.shape_cast %23 : vector<64xf32> to vector<64x1xf32>
    %cst_19 = arith.constant 3.200000e+01 : f32
    %25 = vector.broadcast %cst_19 : f32 to vector<64x1xf32>
    %26 = arith.divf %24, %25 : vector<64x1xf32>
    %27 = vector.broadcast %26 : vector<64x1xf32> to vector<64x32xf32>
    %28 = arith.subf %20, %27 : vector<64x32xf32>
    %29 = arith.mulf %28, %28 : vector<64x32xf32>
    %cst_20 = arith.constant dense<0.000000e+00> : vector<64xf32>
    %30 = vector.multi_reduction <add>, %29, %cst_20 [1] : vector<64x32xf32> to vector<64xf32>
    %31 = vector.shape_cast %30 : vector<64xf32> to vector<64x1xf32>
    %cst_21 = arith.constant 3.200000e+01 : f32
    %32 = vector.broadcast %cst_21 : f32 to vector<64x1xf32>
    %33 = arith.divf %31, %32 : vector<64x1xf32>
    %cst_22 = arith.constant 9.99999974E-6 : f32
    %34 = vector.broadcast %cst_22 : f32 to vector<64x1xf32>
    %35 = arith.addf %33, %34 : vector<64x1xf32>
    %36 = math.rsqrt %35 : vector<64x1xf32>
    %37 = vector.broadcast %36 : vector<64x1xf32> to vector<64x32xf32>
    %38 = arith.mulf %28, %37 : vector<64x32xf32>
    %39 = vector.broadcast %21 : vector<1x32xf32> to vector<64x32xf32>
    %40 = arith.mulf %38, %39 : vector<64x32xf32>
    %41 = vector.broadcast %22 : vector<1x32xf32> to vector<64x32xf32>
    %42 = arith.addf %40, %41 : vector<64x32xf32>
    %c0_23 = arith.constant 0 : index
    %c0_24 = arith.constant 0 : index
    %43 = vector.load %arg4[%c0_23, %c0_24] : memref<2x32xf32, #tpu.memory_space<vmem>>, vector<2x32xf32>
    %cst_25 = arith.constant dense<0.000000e+00> : vector<2xf32>
    %44 = vector.multi_reduction <add>, %43, %cst_25 [1] : vector<2x32xf32> to vector<2xf32>
    %45 = vector.shape_cast %44 : vector<2xf32> to vector<2x1xf32>
    %cst_26 = arith.constant 3.200000e+01 : f32
    %46 = vector.broadcast %cst_26 : f32 to vector<2x1xf32>
    %47 = arith.divf %45, %46 : vector<2x1xf32>
    %48 = vector.broadcast %47 : vector<2x1xf32> to vector<2x32xf32>
    %49 = arith.subf %43, %48 : vector<2x32xf32>
    %50 = arith.mulf %49, %49 : vector<2x32xf32>
    %cst_27 = arith.constant dense<0.000000e+00> : vector<2xf32>
    %51 = vector.multi_reduction <add>, %50, %cst_27 [1] : vector<2x32xf32> to vector<2xf32>
    %52 = vector.shape_cast %51 : vector<2xf32> to vector<2x1xf32>
    %cst_28 = arith.constant 3.200000e+01 : f32
    %53 = vector.broadcast %cst_28 : f32 to vector<2x1xf32>
    %54 = arith.divf %52, %53 : vector<2x1xf32>
    %cst_29 = arith.constant 9.99999974E-6 : f32
    %55 = vector.broadcast %cst_29 : f32 to vector<2x1xf32>
    %56 = arith.addf %54, %55 : vector<2x1xf32>
    %57 = math.rsqrt %56 : vector<2x1xf32>
    %58 = vector.broadcast %57 : vector<2x1xf32> to vector<2x32xf32>
    %59 = arith.mulf %49, %58 : vector<2x32xf32>
    %60 = vector.broadcast %21 : vector<1x32xf32> to vector<2x32xf32>
    %61 = arith.mulf %59, %60 : vector<2x32xf32>
    %62 = vector.broadcast %22 : vector<1x32xf32> to vector<2x32xf32>
    %63 = arith.addf %61, %62 : vector<2x32xf32>
    %64 = vector.extract_strided_slice %63 {offsets = [0, 0], sizes = [1, 32], strides = [1, 1]} : vector<2x32xf32> to vector<1x32xf32>
    %c0_30 = arith.constant 0 : index
    %c0_31 = arith.constant 0 : index
    %65 = vector.load %arg7[%c0_30, %c0_31] : memref<66x32xf32, #tpu.memory_space<vmem>>, vector<1x32xf32>
    tpu.vector_store %arg7[%c0_30, %c0_31], %64 {strides = array<i32>} : memref<66x32xf32, #tpu.memory_space<vmem>>, vector<1x32xf32>,
    %66 = vector.extract_strided_slice %42 {offsets = [0, 0], sizes = [32, 32], strides = [1, 1]} : vector<64x32xf32> to vector<32x32xf32>
    %c1 = arith.constant 1 : index
    %c0_32 = arith.constant 0 : index
    %67 = vector.load %arg7[%c1, %c0_32] : memref<66x32xf32, #tpu.memory_space<vmem>>, vector<32x32xf32>
    tpu.vector_store %arg7[%c1, %c0_32], %66 {strides = array<i32>} : memref<66x32xf32, #tpu.memory_space<vmem>>, vector<32x32xf32>,
    %68 = vector.extract_strided_slice %63 {offsets = [1, 0], sizes = [1, 32], strides = [1, 1]} : vector<2x32xf32> to vector<1x32xf32>
    %c33 = arith.constant 33 : index
    %c0_33 = arith.constant 0 : index
    %69 = vector.load %arg7[%c33, %c0_33] : memref<66x32xf32, #tpu.memory_space<vmem>>, vector<1x32xf32>
    tpu.vector_store %arg7[%c33, %c0_33], %68 {strides = array<i32>} : memref<66x32xf32, #tpu.memory_space<vmem>>, vector<1x32xf32>,
    %70 = vector.extract_strided_slice %42 {offsets = [32, 0], sizes = [32, 32], strides = [1, 1]} : vector<64x32xf32> to vector<32x32xf32>
    %c34 = arith.constant 34 : index
    %c0_34 = arith.constant 0 : index
    %71 = vector.load %arg7[%c34, %c0_34] : memref<66x32xf32, #tpu.memory_space<vmem>>, vector<32x32xf32>
    tpu.vector_store %arg7[%c34, %c0_34], %70 {strides = array<i32>} : memref<66x32xf32, #tpu.memory_space<vmem>>, vector<32x32xf32>,
    return
  }
}

</mosaic_0001>

<llo_original>
// kernel: tpu_custom_call.1
$region0: #{tpu_custom_call.1}
  #allocation0 [shape = 'u32[]', space=smem, size = 0x4, offset = 0x4, fixed_abs, tag = 'smem constant byte address 0x4 - core index']
  #allocation1 [shape = 'u32[144,128]{1,0:T(1,128)}', space=vmem, size = 0x12000, scoped, tag = 'internal scratch']
  %s0 = inlined_call_operand.vmem [shape: f32[4,4,4,32], index: 0, kind: input, shape index: {}]
  %s1 = inlined_call_operand.vmem [shape: f32[4,4,5,32], index: 1, kind: input, shape index: {}]
  %s2 = inlined_call_operand.vmem [shape: f32[4,5,4,32], index: 2, kind: input, shape index: {}]
  %s3 = inlined_call_operand.vmem [shape: f32[4,5,5,32], index: 3, kind: input, shape index: {}]
  %s4 = inlined_call_operand.vmem [shape: f32[2,32], index: 4, kind: input, shape index: {}]
  %s5 = inlined_call_operand.vmem [shape: f32[1,32], index: 5, kind: input, shape index: {}]
  %s6 = inlined_call_operand.vmem [shape: f32[1,32], index: 6, kind: input, shape index: {}]
  %s7 = inlined_call_operand.vmem [shape: f32[66,32], index: 7, kind: output, shape index: {}]
  %s8 = sld [smem:[#allocation0]]
  $region38: #{tpu_custom_call.1} parent=0
    _
  %s10 = ssub.s32 1, %s8
  %s11 = scalar_select 0, %s10, %s8
  // Predicated region
  $region2: #{tpu_custom_call.1} parent=0 // pred_check
    _
  $region3: #{tpu_custom_call.1} parent=0 // pred_check_branch
    %13 = sbr.rel (0) target = $region5
  $region4: #{tpu_custom_call.1} parent=0 // pred_region
    _
  $region5: #{tpu_custom_call.1} parent=0 // pred_fallthru
    _
  // Predicated region
  $region6: #{tpu_custom_call.1} parent=0 // pred_check
    _
  $region7: #{tpu_custom_call.1} parent=0 // pred_check_branch
    %15 = sbr.rel (0) target = $region9
  $region8: #{tpu_custom_call.1} parent=0 // pred_region
    _
  $region9: #{tpu_custom_call.1} parent=0 // pred_fallthru
    _
  // Predicated region
  $region10: #{tpu_custom_call.1} parent=0 // pred_check
    _
  $region11: #{tpu_custom_call.1} parent=0 // pred_check_branch
    %17 = sbr.rel (0) target = $region13
  $region12: #{tpu_custom_call.1} parent=0 // pred_region
    _
  $region13: #{tpu_custom_call.1} parent=0 // pred_fallthru
    _
  // Predicated region
  $region14: #{tpu_custom_call.1} parent=0 // pred_check
    _
  $region15: #{tpu_custom_call.1} parent=0 // pred_check_branch
    %19 = sbr.rel (0) target = $region17
  $region16: #{tpu_custom_call.1} parent=0 // pred_region
    _
  $region17: #{tpu_custom_call.1} parent=0 // pred_fallthru
    _
  // Predicated region
  $region18: #{tpu_custom_call.1} parent=0 // pred_check
    _
  $region19: #{tpu_custom_call.1} parent=0 // pred_check_branch
    %21 = sbr.rel (0) target = $region21
  $region20: #{tpu_custom_call.1} parent=0 // pred_region
    _
  $region21: #{tpu_custom_call.1} parent=0 // pred_fallthru
    _
  // Predicated region
  $region22: #{tpu_custom_call.1} parent=0 // pred_check
    _
  $region23: #{tpu_custom_call.1} parent=0 // pred_check_branch
    %23 = sbr.rel (0) target = $region25
  $region24: #{tpu_custom_call.1} parent=0 // pred_region
    _
  $region25: #{tpu_custom_call.1} parent=0 // pred_fallthru
    _
  // Predicated region
  $region26: #{tpu_custom_call.1} parent=0 // pred_check
    _
  $region27: #{tpu_custom_call.1} parent=0 // pred_check_branch
    %25 = sbr.rel (0) target = $region29
  $region28: #{tpu_custom_call.1} parent=0 // pred_region
    _
  $region29: #{tpu_custom_call.1} parent=0 // pred_fallthru
    _
  %v26 = vld [vmem:[%s0] sm:$0xf]
  %v27 = vld [vmem:[%s0 + $0x4] sm:$0xf]
  %v28 = vld [vmem:[%s0 + $0x8] sm:$0xf]
  %v29 = vld [vmem:[%s0 + $0xc] sm:$0xf]
  %v30 = vld [vmem:[%s0 + $0x10] sm:$0xf]
  %v31 = vld [vmem:[%s0 + $0x14] sm:$0xf]
  %v32 = vld [vmem:[%s0 + $0x18] sm:$0xf]
  %v33 = vld [vmem:[%s0 + $0x1c] sm:$0xf]
  %v34 = vld [vmem:[%s0 + $0x20] sm:$0xf]
  %v35 = vld [vmem:[%s0 + $0x24] sm:$0xf]
  %v36 = vld [vmem:[%s0 + $0x28] sm:$0xf]
  %v37 = vld [vmem:[%s0 + $0x2c] sm:$0xf]
  %v38 = vld [vmem:[%s0 + $0x30] sm:$0xf]
  %v39 = vld [vmem:[%s0 + $0x34] sm:$0xf]
  %v40 = vld [vmem:[%s0 + $0x38] sm:$0xf]
  %v41 = vld [vmem:[%s0 + $0x3c] sm:$0xf]
  %v42 = vld [vmem:[%s1] sm:$0x1f]
  %v43 = vld [vmem:[%s1 + $0x8] sm:$0x1f]
  %v44 = vld [vmem:[%s1 + $0x10] sm:$0x1f]
  %v45 = vld [vmem:[%s1 + $0x18] sm:$0x1f]
  %v46 = vld [vmem:[%s1 + $0x20] sm:$0x1f]
  %v47 = vld [vmem:[%s1 + $0x28] sm:$0x1f]
  %v48 = vld [vmem:[%s1 + $0x30] sm:$0x1f]
  %v49 = vld [vmem:[%s1 + $0x38] sm:$0x1f]
  %v50 = vld [vmem:[%s1 + $0x40] sm:$0x1f]
  %v51 = vld [vmem:[%s1 + $0x48] sm:$0x1f]
  %v52 = vld [vmem:[%s1 + $0x50] sm:$0x1f]
  %v53 = vld [vmem:[%s1 + $0x58] sm:$0x1f]
  %v54 = vld [vmem:[%s1 + $0x60] sm:$0x1f]
  %v55 = vld [vmem:[%s1 + $0x68] sm:$0x1f]
  %v56 = vld [vmem:[%s1 + $0x70] sm:$0x1f]
  %v57 = vld [vmem:[%s1 + $0x78] sm:$0x1f]
  %v58 = vld [vmem:[%s2] sm:$0xf]
  %v59 = vld [vmem:[%s2 + $0x4] sm:$0xf]
  %v60 = vld [vmem:[%s2 + $0x8] sm:$0xf]
  %v61 = vld [vmem:[%s2 + $0xc] sm:$0xf]
  %v62 = vld [vmem:[%s2 + $0x10] sm:$0xf]
  %v63 = vld [vmem:[%s2 + $0x14] sm:$0xf]
  %v64 = vld [vmem:[%s2 + $0x18] sm:$0xf]
  %v65 = vld [vmem:[%s2 + $0x1c] sm:$0xf]
  %v66 = vld [vmem:[%s2 + $0x20] sm:$0xf]
  %v67 = vld [vmem:[%s2 + $0x24] sm:$0xf]
  %v68 = vld [vmem:[%s2 + $0x28] sm:$0xf]
  %v69 = vld [vmem:[%s2 + $0x2c] sm:$0xf]
  %v70 = vld [vmem:[%s2 + $0x30] sm:$0xf]
  %v71 = vld [vmem:[%s2 + $0x34] sm:$0xf]
  %v72 = vld [vmem:[%s2 + $0x38] sm:$0xf]
  %v73 = vld [vmem:[%s2 + $0x3c] sm:$0xf]
  %v74 = vld [vmem:[%s2 + $0x40] sm:$0xf]
  %v75 = vld [vmem:[%s2 + $0x44] sm:$0xf]
  %v76 = vld [vmem:[%s2 + $0x48] sm:$0xf]
  %v77 = vld [vmem:[%s2 + $0x4c] sm:$0xf]
  %v78 = vld [vmem:[%s3] sm:$0x1f]
  %v79 = vld [vmem:[%s3 + $0x8] sm:$0x1f]
  %v80 = vld [vmem:[%s3 + $0x10] sm:$0x1f]
  %v81 = vld [vmem:[%s3 + $0x18] sm:$0x1f]
  %v82 = vld [vmem:[%s3 + $0x20] sm:$0x1f]
  %v83 = vld [vmem:[%s3 + $0x28] sm:$0x1f]
  %v84 = vld [vmem:[%s3 + $0x30] sm:$0x1f]
  %v85 = vld [vmem:[%s3 + $0x38] sm:$0x1f]
  %v86 = vld [vmem:[%s3 + $0x40] sm:$0x1f]
  %v87 = vld [vmem:[%s3 + $0x48] sm:$0x1f]
  %v88 = vld [vmem:[%s3 + $0x50] sm:$0x1f]
  %v89 = vld [vmem:[%s3 + $0x58] sm:$0x1f]
  %v90 = vld [vmem:[%s3 + $0x60] sm:$0x1f]
  %v91 = vld [vmem:[%s3 + $0x68] sm:$0x1f]
  %v92 = vld [vmem:[%s3 + $0x70] sm:$0x1f]
  %v93 = vld [vmem:[%s3 + $0x78] sm:$0x1f]
  %v94 = vld [vmem:[%s3 + $0x80] sm:$0x1f]
  %v95 = vld [vmem:[%s3 + $0x88] sm:$0x1f]
  %v96 = vld [vmem:[%s3 + $0x90] sm:$0x1f]
  %v97 = vld [vmem:[%s3 + $0x98] sm:$0x1f]
  %v98 = vmax.f32 %v26, %v42
  %v99 = vmax.f32 %v27, %v43
  %v100 = vmax.f32 %v28, %v44
  %v101 = vmax.f32 %v29, %v45
  %v102 = vmax.f32 %v30, %v46
  %v103 = vmax.f32 %v31, %v47
  %v104 = vmax.f32 %v32, %v48
  %v105 = vmax.f32 %v33, %v49
  %v106 = vmax.f32 %v34, %v50
  %v107 = vmax.f32 %v35, %v51
  %v108 = vmax.f32 %v36, %v52
  %v109 = vmax.f32 %v37, %v53
  %v110 = vmax.f32 %v38, %v54
  %v111 = vmax.f32 %v39, %v55
  %v112 = vmax.f32 %v40, %v56
  %v113 = vmax.f32 %v41, %v57
  %v130 = vrot.slane %v42, 1
  %v131 = vrot.slane %v43, 1
  %v132 = vrot.slane %v44, 1
  %v133 = vrot.slane %v45, 1
  %v134 = vrot.slane %v46, 1
  %v135 = vrot.slane %v47, 1
  %v136 = vrot.slane %v48, 1
  %v137 = vrot.slane %v49, 1
  %v138 = vrot.slane %v50, 1
  %v139 = vrot.slane %v51, 1
  %v140 = vrot.slane %v52, 1
  %v141 = vrot.slane %v53, 1
  %v142 = vrot.slane %v54, 1
  %v143 = vrot.slane %v55, 1
  %v144 = vrot.slane %v56, 1
  %v145 = vrot.slane %v57, 1
  %v162 = vmax.f32 %v98, %v130
  %v163 = vmax.f32 %v99, %v131
  %v164 = vmax.f32 %v100, %v132
  %v165 = vmax.f32 %v101, %v133
  %v166 = vmax.f32 %v102, %v134
  %v167 = vmax.f32 %v103, %v135
  %v168 = vmax.f32 %v104, %v136
  %v169 = vmax.f32 %v105, %v137
  %v170 = vmax.f32 %v106, %v138
  %v171 = vmax.f32 %v107, %v139
  %v172 = vmax.f32 %v108, %v140
  %v173 = vmax.f32 %v109, %v141
  %v174 = vmax.f32 %v110, %v142
  %v175 = vmax.f32 %v111, %v143
  %v176 = vmax.f32 %v112, %v144
  %v177 = vmax.f32 %v113, %v145
  %v178 = vmax.f32 %v162, %v58
  %v179 = vmax.f32 %v163, %v59
  %v180 = vmax.f32 %v164, %v60
  %v181 = vmax.f32 %v165, %v61
  %v182 = vmax.f32 %v166, %v63
  %v183 = vmax.f32 %v167, %v64
  %v184 = vmax.f32 %v168, %v65
  %v185 = vmax.f32 %v169, %v66
  %v186 = vmax.f32 %v170, %v68
  %v187 = vmax.f32 %v171, %v69
  %v188 = vmax.f32 %v172, %v70
  %v189 = vmax.f32 %v173, %v71
  %v190 = vmax.f32 %v174, %v73
  %v191 = vmax.f32 %v175, %v74
  %v192 = vmax.f32 %v176, %v75
  %v193 = vmax.f32 %v177, %v76
  %v194 = vmax.f32 %v178, %v59
  %v195 = vmax.f32 %v179, %v60
  %v196 = vmax.f32 %v180, %v61
  %v197 = vmax.f32 %v181, %v62
  %v198 = vmax.f32 %v182, %v64
  %v199 = vmax.f32 %v183, %v65
  %v200 = vmax.f32 %v184, %v66
  %v201 = vmax.f32 %v185, %v67
  %v202 = vmax.f32 %v186, %v69
  %v203 = vmax.f32 %v187, %v70
  %v204 = vmax.f32 %v188, %v71
  %v205 = vmax.f32 %v189, %v72
  %v206 = vmax.f32 %v190, %v74
  %v207 = vmax.f32 %v191, %v75
  %v208 = vmax.f32 %v192, %v76
  %v209 = vmax.f32 %v193, %v77
  %v210 = vmax.f32 %v194, %v78
  %v211 = vmax.f32 %v195, %v79
  %v212 = vmax.f32 %v196, %v80
  %v213 = vmax.f32 %v197, %v81
  %v214 = vmax.f32 %v198, %v83
  %v215 = vmax.f32 %v199, %v84
  %v216 = vmax.f32 %v200, %v85
  %v217 = vmax.f32 %v201, %v86
  %v218 = vmax.f32 %v202, %v88
  %v219 = vmax.f32 %v203, %v89
  %v220 = vmax.f32 %v204, %v90
  %v221 = vmax.f32 %v205, %v91
  %v222 = vmax.f32 %v206, %v93
  %v223 = vmax.f32 %v207, %v94
  %v224 = vmax.f32 %v208, %v95
  %v225 = vmax.f32 %v209, %v96
  %v242 = vrot.slane %v78, 1
  %v243 = vrot.slane %v79, 1
  %v244 = vrot.slane %v80, 1
  %v245 = vrot.slane %v81, 1
  %v246 = vrot.slane %v83, 1
  %v247 = vrot.slane %v84, 1
  %v248 = vrot.slane %v85, 1
  %v249 = vrot.slane %v86, 1
  %v250 = vrot.slane %v88, 1
  %v251 = vrot.slane %v89, 1
  %v252 = vrot.slane %v90, 1
  %v253 = vrot.slane %v91, 1
  %v254 = vrot.slane %v93, 1
  %v255 = vrot.slane %v94, 1
  %v256 = vrot.slane %v95, 1
  %v257 = vrot.slane %v96, 1
  %v274 = vmax.f32 %v210, %v242
  %v275 = vmax.f32 %v211, %v243
  %v276 = vmax.f32 %v212, %v244
  %v277 = vmax.f32 %v213, %v245
  %v278 = vmax.f32 %v214, %v246
  %v279 = vmax.f32 %v215, %v247
  %v280 = vmax.f32 %v216, %v248
  %v281 = vmax.f32 %v217, %v249
  %v282 = vmax.f32 %v218, %v250
  %v283 = vmax.f32 %v219, %v251
  %v284 = vmax.f32 %v220, %v252
  %v285 = vmax.f32 %v221, %v253
  %v286 = vmax.f32 %v222, %v254
  %v287 = vmax.f32 %v223, %v255
  %v288 = vmax.f32 %v224, %v256
  %v289 = vmax.f32 %v225, %v257
  %v290 = vmax.f32 %v274, %v79
  %v291 = vmax.f32 %v275, %v80
  %v292 = vmax.f32 %v276, %v81
  %v293 = vmax.f32 %v277, %v82
  %v294 = vmax.f32 %v278, %v84
  %v295 = vmax.f32 %v279, %v85
  %v296 = vmax.f32 %v280, %v86
  %v297 = vmax.f32 %v281, %v87
  %v298 = vmax.f32 %v282, %v89
  %v299 = vmax.f32 %v283, %v90
  %v300 = vmax.f32 %v284, %v91
  %v301 = vmax.f32 %v285, %v92
  %v302 = vmax.f32 %v286, %v94
  %v303 = vmax.f32 %v287, %v95
  %v304 = vmax.f32 %v288, %v96
  %v305 = vmax.f32 %v289, %v97
  %v310 = vrot.slane %v82, 1
  %v311 = vrot.slane %v87, 1
  %v312 = vrot.slane %v92, 1
  %v313 = vrot.slane %v97, 1
  %v318 = vmax.f32 %v290, %v243
  %v319 = vmax.f32 %v291, %v244
  %v320 = vmax.f32 %v292, %v245
  %v321 = vmax.f32 %v293, %v310
  %v322 = vmax.f32 %v294, %v247
  %v323 = vmax.f32 %v295, %v248
  %v324 = vmax.f32 %v296, %v249
  %v325 = vmax.f32 %v297, %v311
  %v326 = vmax.f32 %v298, %v251
  %v327 = vmax.f32 %v299, %v252
  %v328 = vmax.f32 %v300, %v253
  %v329 = vmax.f32 %v301, %v312
  %v330 = vmax.f32 %v302, %v255
  %v331 = vmax.f32 %v303, %v256
  %v332 = vmax.f32 %v304, %v257
  %v333 = vmax.f32 %v305, %v313
  %v334 = vld [vmem:[%s5] sm:$0x1]
  %v335 = vld [vmem:[%s6] sm:$0x1]
  %v352 = vcombine.low %v318, %v319
  %v353 = vcombine.low %v320, %v321
  %v354 = vcombine.low %v322, %v323
  %v355 = vcombine.low %v324, %v325
  %v356 = vcombine.low %v326, %v327
  %v357 = vcombine.low %v328, %v329
  %v358 = vcombine.low %v330, %v331
  %v359 = vcombine.low %v332, %v333
  %vm368 = vcmask 261120
  %v369 = vsel %vm368, %v352, 0.0
  %370 = vadd.xlane.f32.xlu0 %v369
  %v371 = vpop.xlane.xlu0 %370
  %v372 = vsel %vm368, %v353, 0.0
  %373 = vadd.xlane.f32.xlu0 %v372
  %v374 = vpop.xlane.xlu0 %373
  %v375 = vsel %vm368, %v354, 0.0
  %376 = vadd.xlane.f32.xlu0 %v375
  %v377 = vpop.xlane.xlu0 %376
  %v378 = vsel %vm368, %v355, 0.0
  %379 = vadd.xlane.f32.xlu0 %v378
  %v380 = vpop.xlane.xlu0 %379
  %v381 = vsel %vm368, %v356, 0.0
  %382 = vadd.xlane.f32.xlu0 %v381
  %v383 = vpop.xlane.xlu0 %382
  %v384 = vsel %vm368, %v357, 0.0
  %385 = vadd.xlane.f32.xlu0 %v384
  %v386 = vpop.xlane.xlu0 %385
  %v387 = vsel %vm368, %v358, 0.0
  %388 = vadd.xlane.f32.xlu0 %v387
  %v389 = vpop.xlane.xlu0 %388
  %v390 = vsel %vm368, %v359, 0.0
  %391 = vadd.xlane.f32.xlu0 %v390
  %v392 = vpop.xlane.xlu0 %391
  %v393 = vrcp.pop 32.0
  %v394 = vmul.f32 %v371, %v393
  %v395 = vmul.f32 %v374, %v393
  %v396 = vmul.f32 %v377, %v393
  %v397 = vmul.f32 %v380, %v393
  %v398 = vmul.f32 %v383, %v393
  %v399 = vmul.f32 %v386, %v393
  %v400 = vmul.f32 %v389, %v393
  %v401 = vmul.f32 %v392, %v393
  %v411 = vunpack.c.l.s4 839922192
  %v412 = vunpack.c.0.s8 %v411
  %v413 = vlaneseq
  %v414 = vshrl.u32 %v413, 7
  %v415 = vsub.s32 %v412, %v414
  %v416 = vrot.slane %v394, %v415
  %v418 = vunpack.c.l.s4 1985246804
  %v419 = vunpack.c.0.s8 %v418
  %v420 = vlaneseq
  %v421 = vshrl.u32 %v420, 7
  %v422 = vsub.s32 %v419, %v421
  %v423 = vrot.slane %v394, %v422
  %v425 = vunpack.c.l.s4 839922192
  %v426 = vunpack.c.0.s8 %v425
  %v427 = vlaneseq
  %v428 = vshrl.u32 %v427, 7
  %v429 = vsub.s32 %v426, %v428
  %v430 = vrot.slane %v395, %v429
  %v432 = vunpack.c.l.s4 1985246804
  %v433 = vunpack.c.0.s8 %v432
  %v434 = vlaneseq
  %v435 = vshrl.u32 %v434, 7
  %v436 = vsub.s32 %v433, %v435
  %v437 = vrot.slane %v395, %v436
  %v439 = vunpack.c.l.s4 839922192
  %v440 = vunpack.c.0.s8 %v439
  %v441 = vlaneseq
  %v442 = vshrl.u32 %v441, 7
  %v443 = vsub.s32 %v440, %v442
  %v444 = vrot.slane %v396, %v443
  %v446 = vunpack.c.l.s4 1985246804
  %v447 = vunpack.c.0.s8 %v446
  %v448 = vlaneseq
  %v449 = vshrl.u32 %v448, 7
  %v450 = vsub.s32 %v447, %v449
  %v451 = vrot.slane %v396, %v450
  %v453 = vunpack.c.l.s4 839922192
  %v454 = vunpack.c.0.s8 %v453
  %v455 = vlaneseq
  %v456 = vshrl.u32 %v455, 7
  %v457 = vsub.s32 %v454, %v456
  %v458 = vrot.slane %v397, %v457
  %v460 = vunpack.c.l.s4 1985246804
  %v461 = vunpack.c.0.s8 %v460
  %v462 = vlaneseq
  %v463 = vshrl.u32 %v462, 7
  %v464 = vsub.s32 %v461, %v463
  %v465 = vrot.slane %v397, %v464
  %v467 = vunpack.c.l.s4 839922192
  %v468 = vunpack.c.0.s8 %v467
  %v469 = vlaneseq
  %v470 = vshrl.u32 %v469, 7
  %v471 = vsub.s32 %v468, %v470
  %v472 = vrot.slane %v398, %v471
  %v474 = vunpack.c.l.s4 1985246804
  %v475 = vunpack.c.0.s8 %v474
  %v476 = vlaneseq
  %v477 = vshrl.u32 %v476, 7
  %v478 = vsub.s32 %v475, %v477
  %v479 = vrot.slane %v398, %v478
  %v481 = vunpack.c.l.s4 839922192
  %v482 = vunpack.c.0.s8 %v481
  %v483 = vlaneseq
  %v484 = vshrl.u32 %v483, 7
  %v485 = vsub.s32 %v482, %v484
  %v486 = vrot.slane %v399, %v485
  %v488 = vunpack.c.l.s4 1985246804
  %v489 = vunpack.c.0.s8 %v488
  %v490 = vlaneseq
  %v491 = vshrl.u32 %v490, 7
  %v492 = vsub.s32 %v489, %v491
  %v493 = vrot.slane %v399, %v492
  %v495 = vunpack.c.l.s4 839922192
  %v496 = vunpack.c.0.s8 %v495
  %v497 = vlaneseq
  %v498 = vshrl.u32 %v497, 7
  %v499 = vsub.s32 %v496, %v498
  %v500 = vrot.slane %v400, %v499
  %v502 = vunpack.c.l.s4 1985246804
  %v503 = vunpack.c.0.s8 %v502
  %v504 = vlaneseq
  %v505 = vshrl.u32 %v504, 7
  %v506 = vsub.s32 %v503, %v505
  %v507 = vrot.slane %v400, %v506
  %v509 = vunpack.c.l.s4 839922192
  %v510 = vunpack.c.0.s8 %v509
  %v511 = vlaneseq
  %v512 = vshrl.u32 %v511, 7
  %v513 = vsub.s32 %v510, %v512
  %v514 = vrot.slane %v401, %v513
  %v516 = vunpack.c.l.s4 1985246804
  %v517 = vunpack.c.0.s8 %v516
  %v518 = vlaneseq
  %v519 = vshrl.u32 %v518, 7
  %v520 = vsub.s32 %v517, %v519
  %v521 = vrot.slane %v401, %v520
  %v538 = vsub.f32 %v318, %v416
  %v539 = vsub.f32 %v319, %v423
  %v540 = vsub.f32 %v320, %v430
  %v541 = vsub.f32 %v321, %v437
  %v542 = vsub.f32 %v322, %v444
  %v543 = vsub.f32 %v323, %v451
  %v544 = vsub.f32 %v324, %v458
  %v545 = vsub.f32 %v325, %v465
  %v546 = vsub.f32 %v326, %v472
  %v547 = vsub.f32 %v327, %v479
  %v548 = vsub.f32 %v328, %v486
  %v549 = vsub.f32 %v329, %v493
  %v550 = vsub.f32 %v330, %v500
  %v551 = vsub.f32 %v331, %v507
  %v552 = vsub.f32 %v332, %v514
  %v553 = vsub.f32 %v333, %v521
  %v554 = vmul.f32 %v538, %v538
  %v555 = vmul.f32 %v539, %v539
  %v556 = vmul.f32 %v540, %v540
  %v557 = vmul.f32 %v541, %v541
  %v558 = vmul.f32 %v542, %v542
  %v559 = vmul.f32 %v543, %v543
  %v560 = vmul.f32 %v544, %v544
  %v561 = vmul.f32 %v545, %v545
  %v562 = vmul.f32 %v546, %v546
  %v563 = vmul.f32 %v547, %v547
  %v564 = vmul.f32 %v548, %v548
  %v565 = vmul.f32 %v549, %v549
  %v566 = vmul.f32 %v550, %v550
  %v567 = vmul.f32 %v551, %v551
  %v568 = vmul.f32 %v552, %v552
  %v569 = vmul.f32 %v553, %v553
  %v586 = vcombine.low %v554, %v555
  %v587 = vcombine.low %v556, %v557
  %v588 = vcombine.low %v558, %v559
  %v589 = vcombine.low %v560, %v561
  %v590 = vcombine.low %v562, %v563
  %v591 = vcombine.low %v564, %v565
  %v592 = vcombine.low %v566, %v567
  %v593 = vcombine.low %v568, %v569
  %v602 = vsel %vm368, %v586, 0.0
  %603 = vadd.xlane.f32.xlu0 %v602
  %v604 = vpop.xlane.xlu0 %603
  %v605 = vsel %vm368, %v587, 0.0
  %606 = vadd.xlane.f32.xlu0 %v605
  %v607 = vpop.xlane.xlu0 %606
  %v608 = vsel %vm368, %v588, 0.0
  %609 = vadd.xlane.f32.xlu0 %v608
  %v610 = vpop.xlane.xlu0 %609
  %v611 = vsel %vm368, %v589, 0.0
  %612 = vadd.xlane.f32.xlu0 %v611
  %v613 = vpop.xlane.xlu0 %612
  %v614 = vsel %vm368, %v590, 0.0
  %615 = vadd.xlane.f32.xlu0 %v614
  %v616 = vpop.xlane.xlu0 %615
  %v617 = vsel %vm368, %v591, 0.0
  %618 = vadd.xlane.f32.xlu0 %v617
  %v619 = vpop.xlane.xlu0 %618
  %v620 = vsel %vm368, %v592, 0.0
  %621 = vadd.xlane.f32.xlu0 %v620
  %v622 = vpop.xlane.xlu0 %621
  %v623 = vsel %vm368, %v593, 0.0
  %624 = vadd.xlane.f32.xlu0 %v623
  %v625 = vpop.xlane.xlu0 %624
  %v626 = vmul.f32 %v604, %v393
  %v627 = vmul.f32 %v607, %v393
  %v628 = vmul.f32 %v610, %v393
  %v629 = vmul.f32 %v613, %v393
  %v630 = vmul.f32 %v616, %v393
  %v631 = vmul.f32 %v619, %v393
  %v632 = vmul.f32 %v622, %v393
  %v633 = vmul.f32 %v625, %v393
  %v634 = vadd.f32 %v626, 1e-05
  %v635 = vadd.f32 %v627, 1e-05
  %v636 = vadd.f32 %v628, 1e-05
  %v637 = vadd.f32 %v629, 1e-05
  %v638 = vadd.f32 %v630, 1e-05
  %v639 = vadd.f32 %v631, 1e-05
  %v640 = vadd.f32 %v632, 1e-05
  %v641 = vadd.f32 %v633, 1e-05
  %v642 = vrsqrt.pop %v634
  %v643 = vrsqrt.pop %v635
  %v644 = vrsqrt.pop %v636
  %v645 = vrsqrt.pop %v637
  %v646 = vrsqrt.pop %v638
  %v647 = vrsqrt.pop %v639
  %v648 = vrsqrt.pop %v640
  %v649 = vrsqrt.pop %v641
  %v659 = vunpack.c.l.s4 839922192
  %v660 = vunpack.c.0.s8 %v659
  %v661 = vlaneseq
  %v662 = vshrl.u32 %v661, 7
  %v663 = vsub.s32 %v660, %v662
  %v664 = vrot.slane %v642, %v663
  %v666 = vunpack.c.l.s4 1985246804
  %v667 = vunpack.c.0.s8 %v666
  %v668 = vlaneseq
  %v669 = vshrl.u32 %v668, 7
  %v670 = vsub.s32 %v667, %v669
  %v671 = vrot.slane %v642, %v670
  %v673 = vunpack.c.l.s4 839922192
  %v674 = vunpack.c.0.s8 %v673
  %v675 = vlaneseq
  %v676 = vshrl.u32 %v675, 7
  %v677 = vsub.s32 %v674, %v676
  %v678 = vrot.slane %v643, %v677
  %v680 = vunpack.c.l.s4 1985246804
  %v681 = vunpack.c.0.s8 %v680
  %v682 = vlaneseq
  %v683 = vshrl.u32 %v682, 7
  %v684 = vsub.s32 %v681, %v683
  %v685 = vrot.slane %v643, %v684
  %v687 = vunpack.c.l.s4 839922192
  %v688 = vunpack.c.0.s8 %v687
  %v689 = vlaneseq
  %v690 = vshrl.u32 %v689, 7
  %v691 = vsub.s32 %v688, %v690
  %v692 = vrot.slane %v644, %v691
  %v694 = vunpack.c.l.s4 1985246804
  %v695 = vunpack.c.0.s8 %v694
  %v696 = vlaneseq
  %v697 = vshrl.u32 %v696, 7
  %v698 = vsub.s32 %v695, %v697
  %v699 = vrot.slane %v644, %v698
  %v701 = vunpack.c.l.s4 839922192
  %v702 = vunpack.c.0.s8 %v701
  %v703 = vlaneseq
  %v704 = vshrl.u32 %v703, 7
  %v705 = vsub.s32 %v702, %v704
  %v706 = vrot.slane %v645, %v705
  %v708 = vunpack.c.l.s4 1985246804
  %v709 = vunpack.c.0.s8 %v708
  %v710 = vlaneseq
  %v711 = vshrl.u32 %v710, 7
  %v712 = vsub.s32 %v709, %v711
  %v713 = vrot.slane %v645, %v712
  %v715 = vunpack.c.l.s4 839922192
  %v716 = vunpack.c.0.s8 %v715
  %v717 = vlaneseq
  %v718 = vshrl.u32 %v717, 7
  %v719 = vsub.s32 %v716, %v718
  %v720 = vrot.slane %v646, %v719
  %v722 = vunpack.c.l.s4 1985246804
  %v723 = vunpack.c.0.s8 %v722
  %v724 = vlaneseq
  %v725 = vshrl.u32 %v724, 7
  %v726 = vsub.s32 %v723, %v725
  %v727 = vrot.slane %v646, %v726
  %v729 = vunpack.c.l.s4 839922192
  %v730 = vunpack.c.0.s8 %v729
  %v731 = vlaneseq
  %v732 = vshrl.u32 %v731, 7
  %v733 = vsub.s32 %v730, %v732
  %v734 = vrot.slane %v647, %v733
  %v736 = vunpack.c.l.s4 1985246804
  %v737 = vunpack.c.0.s8 %v736
  %v738 = vlaneseq
  %v739 = vshrl.u32 %v738, 7
  %v740 = vsub.s32 %v737, %v739
  %v741 = vrot.slane %v647, %v740
  %v743 = vunpack.c.l.s4 839922192
  %v744 = vunpack.c.0.s8 %v743
  %v745 = vlaneseq
  %v746 = vshrl.u32 %v745, 7
  %v747 = vsub.s32 %v744, %v746
  %v748 = vrot.slane %v648, %v747
  %v750 = vunpack.c.l.s4 1985246804
  %v751 = vunpack.c.0.s8 %v750
  %v752 = vlaneseq
  %v753 = vshrl.u32 %v752, 7
  %v754 = vsub.s32 %v751, %v753
  %v755 = vrot.slane %v648, %v754
  %v757 = vunpack.c.l.s4 839922192
  %v758 = vunpack.c.0.s8 %v757
  %v759 = vlaneseq
  %v760 = vshrl.u32 %v759, 7
  %v761 = vsub.s32 %v758, %v760
  %v762 = vrot.slane %v649, %v761
  %v764 = vunpack.c.l.s4 1985246804
  %v765 = vunpack.c.0.s8 %v764
  %v766 = vlaneseq
  %v767 = vshrl.u32 %v766, 7
  %v768 = vsub.s32 %v765, %v767
  %v769 = vrot.slane %v649, %v768
  %v786 = vmul.f32 %v538, %v664
  %v787 = vmul.f32 %v539, %v671
  %v788 = vmul.f32 %v540, %v678
  %v789 = vmul.f32 %v541, %v685
  %v790 = vmul.f32 %v542, %v692
  %v791 = vmul.f32 %v543, %v699
  %v792 = vmul.f32 %v544, %v706
  %v793 = vmul.f32 %v545, %v713
  %v794 = vmul.f32 %v546, %v720
  %v795 = vmul.f32 %v547, %v727
  %v796 = vmul.f32 %v548, %v734
  %v797 = vmul.f32 %v549, %v741
  %v798 = vmul.f32 %v550, %v748
  %v799 = vmul.f32 %v551, %v755
  %v800 = vmul.f32 %v552, %v762
  %v801 = vmul.f32 %v553, %v769
  %v803 = vlaneseq
  %v804 = vshrl.u32 %v803, 7
  %v805 = vsub.s32 0, %v804
  %v806 = vrot.slane %v334, %v805
  %v808 = vcombine.high %v806, %v806
  %v810 = vmul.f32 %v786, %v806
  %v811 = vmul.f32 %v787, %v808
  %v812 = vmul.f32 %v788, %v806
  %v813 = vmul.f32 %v789, %v808
  %v814 = vmul.f32 %v790, %v806
  %v815 = vmul.f32 %v791, %v808
  %v816 = vmul.f32 %v792, %v806
  %v817 = vmul.f32 %v793, %v808
  %v818 = vmul.f32 %v794, %v806
  %v819 = vmul.f32 %v795, %v808
  %v820 = vmul.f32 %v796, %v806
  %v821 = vmul.f32 %v797, %v808
  %v822 = vmul.f32 %v798, %v806
  %v823 = vmul.f32 %v799, %v808
  %v824 = vmul.f32 %v800, %v806
  %v825 = vmul.f32 %v801, %v808
  %v827 = vlaneseq
  %v828 = vshrl.u32 %v827, 7
  %v829 = vsub.s32 0, %v828
  %v830 = vrot.slane %v335, %v829
  %v832 = vcombine.high %v830, %v830
  %v834 = vadd.f32 %v810, %v830
  %v835 = vadd.f32 %v811, %v832
  %v836 = vadd.f32 %v812, %v830
  %v837 = vadd.f32 %v813, %v832
  %v838 = vadd.f32 %v814, %v830
  %v839 = vadd.f32 %v815, %v832
  %v840 = vadd.f32 %v816, %v830
  %v841 = vadd.f32 %v817, %v832
  %v842 = vadd.f32 %v818, %v830
  %v843 = vadd.f32 %v819, %v832
  %v844 = vadd.f32 %v820, %v830
  %v845 = vadd.f32 %v821, %v832
  %v846 = vadd.f32 %v822, %v830
  %v847 = vadd.f32 %v823, %v832
  %v848 = vadd.f32 %v824, %v830
  %v849 = vadd.f32 %v825, %v832
  %v850 = vld [vmem:[%s4] sm:$0x3]
  %vm851 = vcmask 254976
  %v852 = vsel %vm851, %v850, 0.0
  %853 = vadd.xlane.f32.xlu0 %v852
  %v854 = vpop.xlane.xlu0 %853
  %v855 = vmul.f32 %v854, %v393
  %v856 = vsub.f32 %v850, %v855
  %v857 = vmul.f32 %v856, %v856
  %v858 = vsel %vm851, %v857, 0.0
  %859 = vadd.xlane.f32.xlu0 %v858
  %v860 = vpop.xlane.xlu0 %859
  %v861 = vmul.f32 %v860, %v393
  %v862 = vadd.f32 %v861, 1e-05
  %v863 = vrsqrt.pop %v862
  %v864 = vmul.f32 %v856, %v863
  %v865 = vmul.f32 %v864, %v806
  %v866 = vadd.f32 %v865, %v830
  %vm867 = vcmask 253952
  %868 = vst.msk [vmem:[%s7] sm:$0x1] %vm867, %v866
  %v877 = vcombine.low %v834, %v835
  %v878 = vcombine.low %v836, %v837
  %v879 = vcombine.low %v838, %v839
  %v880 = vcombine.low %v840, %v841
  %885 = vst.msk [vmem:[%s7 + $0x1] sm:$0xff] %vm368, %v877
  %886 = vst.msk [vmem:[%s7 + $0x9] sm:$0xff] %vm368, %v878
  %887 = vst.msk [vmem:[%s7 + $0x11] sm:$0xff] %vm368, %v879
  %888 = vst.msk [vmem:[%s7 + $0x19] sm:$0xff] %vm368, %v880
  %vm889 = vcmask 254977
  %890 = vst.msk [vmem:[%s7 + $0x20] sm:$0x2] %vm889, %v866
  %v899 = vcombine.low %v842, %v843
  %v900 = vcombine.low %v844, %v845
  %v901 = vcombine.low %v846, %v847
  %v902 = vcombine.low %v848, %v849
  %907 = vst.msk [vmem:[%s7 + $0x22] sm:$0xff] %vm368, %v899
  %908 = vst.msk [vmem:[%s7 + $0x2a] sm:$0xff] %vm368, %v900
  %909 = vst.msk [vmem:[%s7 + $0x32] sm:$0xff] %vm368, %v901
  %910 = vst.msk [vmem:[%s7 + $0x3a] sm:$0xff] %vm368, %v902
  // Predicated region
  $region30: #{tpu_custom_call.1} parent=0 // pred_check
    _
  $region31: #{tpu_custom_call.1} parent=0 // pred_check_branch
    %912 = sbr.rel (0) target = $region33
  $region32: #{tpu_custom_call.1} parent=0 // pred_region
    _
  $region33: #{tpu_custom_call.1} parent=0 // pred_fallthru
    _
  // Predicated region
  $region34: #{tpu_custom_call.1} parent=0 // pred_check
    _
  $region35: #{tpu_custom_call.1} parent=0 // pred_check_branch
    %914 = sbr.rel (0) target = $region37
  $region36: #{tpu_custom_call.1} parent=0 // pred_region
    _
  $region37: #{tpu_custom_call.1} parent=0 // pred_fallthru
    _

</llo_original>
